<compile_context>
chip_gen: v7x
topology: tpu7x:2x2x1
jax: 0.10.0
libtpu: 0.0.40
codegen_flags: <defaults>
</compile_context>

<pallas_src>
import functools

import jax
import jax.numpy as jnp
from jax.experimental import pallas as pl
from jax.experimental.pallas import tpu as pltpu

C_MID = 256  # ASPP internal channel count (fixed by the module)


def _round_up(x, m):
    return -(-x // m) * m


# ---------------------------------------------------------------------------
# Fused Pallas kernel: one lane-dense MXU matmul + f32 bias epilogue per tile
# ---------------------------------------------------------------------------
def _matmul_bias_kernel(x_ref, w_ref, b_ref, o_ref):
    # x_ref: (1, tm, Kp)   bf16  -- im2col'd activations (taps concatenated on K)
    # w_ref: (Kp, 256)     bf16  -- all folded tap weights (BN/concate_conv fused)
    # b_ref: (1, 1, 256)   f32   -- per-image fused bias (pool branch + BN biases)
    # o_ref: (1, tm, 256)  out dtype
    acc = jnp.dot(x_ref[0], w_ref[...], preferred_element_type=jnp.float32)
    o_ref[0] = (acc + b_ref[0]).astype(o_ref.dtype)


# ---------------------------------------------------------------------------
# Helpers
# ---------------------------------------------------------------------------
def _fold_bn(gamma, beta, mean, var, eps=1e-5):
    scale = gamma / jnp.sqrt(var + eps)
    bias = beta - mean * scale
    return scale, bias


def _conv3x3_weight_to_matrix(w_oihw):
    """(Cout, Cin, 3, 3) -> (9*Cin, Cout) with (ky, kx, cin) row ordering."""
    return jnp.transpose(w_oihw, (2, 3, 1, 0)).reshape(-1, w_oihw.shape[0])


def _choose_m_tile(m, target=512):
    """Row tile for the flattened spatial axis.

    Multiple of 8 (sublane), ~`target` rows per tile, and >=2 row tiles when
    there is enough work so input prefetch overlaps compute.  Returns
    (tm, m_pad) with m_pad = n_tiles * tm >= m (rows are zero-padded).
    """
    m8 = _round_up(m, 8)
    n_tiles = max(2 if m8 >= 256 else 1, int(round(m8 / target)))
    tm = _round_up(-(-m8 // n_tiles), 8)
    return tm, n_tiles * tm


# ---------------------------------------------------------------------------
# Parameter construction (deterministic, synthetic, inference-mode BN)
# ---------------------------------------------------------------------------
def make_params(key, c_in, dilations, c_mid=C_MID):
    keys = iter(jax.random.split(key, 32))

    def bn(c):
        gamma = 1.0 + 0.1 * jax.random.normal(next(keys), (c,), jnp.float32)
        beta = 0.1 * jax.random.normal(next(keys), (c,), jnp.float32)
        mean = 0.05 * jax.random.normal(next(keys), (c,), jnp.float32)
        var = 1.0 + 0.1 * jax.random.uniform(next(keys), (c,), jnp.float32)
        return _fold_bn(gamma, beta, mean, var)

    p = {}
    # conv11: 1x1, c_in -> 256 (shared by branch 1 and the image-pool branch)
    p['w11'] = 0.1 * jax.random.normal(next(keys), (c_in, c_mid), jnp.float32)
    p['s11'], p['b11'] = bn(c_mid)
    # three 3x3 dilated convs
    for i, _ in enumerate(dilations):
        w = 0.1 * jax.random.normal(next(keys), (c_mid, c_in, 3, 3), jnp.float32)
        p[f'w33_{i}'] = _conv3x3_weight_to_matrix(w)          # (9*c_in, 256)
        p[f's33_{i}'], p[f'b33_{i}'] = bn(c_mid)
    # concate_conv: 1x1, 5*256 -> 256
    p['w_cat'] = 0.05 * jax.random.normal(next(keys), (5 * c_mid, c_mid), jnp.float32)
    p['s_cat'], p['b_cat'] = bn(c_mid)
    return p


# ---------------------------------------------------------------------------
# ASPP_plus forward (single pallas_call)
# ---------------------------------------------------------------------------
@functools.partial(jax.jit, static_argnames=("dilations", "out_dtype", "layout"))
def aspp_plus_forward(x_nchw, params, dilations,
                      out_dtype=jnp.float32, layout="NCHW"):
    N, C, H, W = x_nchw.shape
    dmax = max(dilations)
    x = jnp.transpose(x_nchw, (0, 2, 3, 1)).astype(jnp.float32)          # NHWC

    # ---- fold branch BNs + concate_conv + cat-BN scale into tap weights (f32) ----
    Wc, s_cat, b_cat = params['w_cat'], params['s_cat'], params['b_cat']

    tap_offsets = [(0, 0)]                                               # 1x1 branch
    tap_weights = [params['w11'] @ (params['s11'][:, None] * Wc[:C_MID])]
    bias_const = params['b11'] @ Wc[:C_MID]

    for i, d in enumerate(dilations):                                    # 3x3 branches
        Wci = Wc[(i + 1) * C_MID:(i + 2) * C_MID]
        w_eff = params[f'w33_{i}'] @ (params[f's33_{i}'][:, None] * Wci)  # (9C, 256)
        bias_const = bias_const + params[f'b33_{i}'] @ Wci
        w_eff = w_eff.reshape(3, 3, C, C_MID)
        for ky in range(3):
            for kx in range(3):
                tap_offsets.append(((ky - 1) * d, (kx - 1) * d))
                tap_weights.append(w_eff[ky, kx])

    T = len(tap_offsets)                   # 1 + 9*len(dilations)  (= 28 here)
    K = T * C                              # concatenated contraction dim
    k_pad = _round_up(K, 128)              # lane-dense & MXU-depth aligned

    # Folding is done in f32; only the final operands are cast to bf16.
    w_flat = (jnp.stack(tap_weights, axis=0) * s_cat[None, None, :]).reshape(K, C_MID)
    w_flat = jnp.pad(w_flat, ((0, k_pad - K), (0, 0))).astype(jnp.bfloat16)

    # ---- image-pool branch + all BN biases -> per-image f32 additive bias ----
    pooled = jnp.mean(x, axis=(1, 2))                                     # (N, C)
    pooled_bn = (pooled @ params['w11']) * params['s11'][None, :] + params['b11'][None, :]
    pool_contrib = pooled_bn @ Wc[4 * C_MID:]                             # (N, 256)
    total_bias = ((bias_const[None, :] + pool_contrib) * s_cat[None, :]
                  + b_cat[None, :]).reshape(N, 1, C_MID).astype(jnp.float32)

    # ---- host-side im2col: taps concatenated along a lane-dense K axis ----
    # With tiny C_in (4 here) this is cheap and feeds the MXU one K=128
    # contraction instead of 28 K=4 dots + 27 f32 accumulator RMWs.
    # TODO(synk): for production channel counts (C_in ~ 1280-2048) this im2col
    # blows up HBM ~28x; switch to an in-VMEM gather over a row-banded, halo'd
    # activation block with a trailing "arbitrary" K/tap grid axis + f32 VMEM
    # scratch accumulator, and pl.Buffered(1) on the then-large resident weight
    # block, so VMEM scales with the band and fits v7x's 64 MiB.
    xpad = jnp.pad(x, ((0, 0), (dmax, dmax), (dmax, dmax), (0, 0))).astype(jnp.bfloat16)
    cols = [jax.lax.slice(xpad, (0, dmax + dy, dmax + dx, 0),
                          (N, dmax + dy + H, dmax + dx + W, C))
            for (dy, dx) in tap_offsets]

    M = H * W
    tm, m_pad = _choose_m_tile(M)
    im2col = jnp.concatenate(cols, axis=-1).reshape(N, M, K)
    im2col = jnp.pad(im2col, ((0, 0), (0, m_pad - M), (0, k_pad - K)))    # bf16

    grid = (N, m_pad // tm)
    out_itemsize = jnp.dtype(out_dtype).itemsize
    cost = pl.CostEstimate(
        flops=2 * N * m_pad * k_pad * C_MID,
        transcendentals=0,
        bytes_accessed=(N * m_pad * k_pad * 2          # im2col activations (bf16)
                        + k_pad * C_MID * 2            # folded weights (bf16)
                        + N * C_MID * 4                # fused bias (f32)
                        + N * m_pad * C_MID * out_itemsize))

    out2d = pl.pallas_call(
        _matmul_bias_kernel,
        out_shape=jax.ShapeDtypeStruct((N, m_pad, C_MID), out_dtype),
        grid_spec=pltpu.PrefetchScalarGridSpec(
            num_scalar_prefetch=0,
            grid=grid,
            in_specs=[
                # im2col'd activations, one (row-tile, K) slab per grid step
                pl.BlockSpec((1, tm, k_pad), lambda n, mt: (n, mt, 0)),
                # folded tap weights, resident across the whole grid
                pl.BlockSpec((k_pad, C_MID), lambda n, mt: (0, 0)),
                # per-image fused bias (f32 epilogue)
                pl.BlockSpec((1, 1, C_MID), lambda n, mt: (n, 0, 0)),
            ],
            out_specs=pl.BlockSpec((1, tm, C_MID), lambda n, mt: (n, mt, 0)),
        ),
        compiler_params=pltpu.CompilerParams(
            dimension_semantics=("parallel", "parallel"),
            vmem_limit_bytes=64 * 1024 * 1024,
        ),
        cost_estimate=cost,
    )(im2col, w_flat, total_bias)

    out = out2d[:, :M, :].reshape(N, H, W, C_MID)
    if layout == "NCHW":                   # module-parity layout (extra transpose)
        out = jnp.transpose(out, (0, 3, 1, 2))
    return out                             # layout == "NHWC": no wrapper transpose


# ---------------------------------------------------------------------------
# Pure-JAX reference of the original (unfused) module, for a sanity check
# ---------------------------------------------------------------------------
def _reference_forward(x_nchw, params, dilations):
    N, C, H, W = x_nchw.shape
    hp = jax.lax.Precision.HIGHEST
    x = jnp.transpose(x_nchw, (0, 2, 3, 1)).astype(jnp.float32)          # NHWC

    def bn(y, s, b):
        return y * s + b

    branches = [bn(jnp.einsum('nhwc,co->nhwo', x, params['w11'], precision=hp),
                   params['s11'], params['b11'])]
    for i, d in enumerate(dilations):
        w = params[f'w33_{i}'].reshape(3, 3, C, C_MID)                    # HWIO
        y = jax.lax.conv_general_dilated(
            x, w, window_strides=(1, 1), padding=[(d, d), (d, d)],
            rhs_dilation=(d, d), dimension_numbers=('NHWC', 'HWIO', 'NHWC'),
            precision=hp)
        branches.append(bn(y, params[f's33_{i}'], params[f'b33_{i}']))
    pooled = jnp.mean(x, axis=(1, 2))
    pb = bn(pooled @ params['w11'], params['s11'], params['b11'])
    # bilinear align_corners=True upsample of a 1x1 map is an exact broadcast
    branches.append(jnp.broadcast_to(pb[:, None, None, :], (N, H, W, C_MID)))
    concat = jnp.concatenate(branches, axis=-1)
    out = bn(jnp.einsum('nhwk,ko->nhwo', concat, params['w_cat'], precision=hp),
             params['s_cat'], params['b_cat'])
    return jnp.transpose(out, (0, 3, 1, 2))


# ---------------------------------------------------------------------------
if __name__ == "__main__":
    key = jax.random.PRNGKey(0)
    k_x, k_p = jax.random.split(key)

    # params.c[-1] = 4 input channels; params.aspp = (2, 4, 6) dilations
    N, C_in, H, W = 2, 4, 16, 16
    dilations = (2, 4, 6)

    x = jax.random.normal(k_x, (N, C_in, H, W), jnp.float32)
    params = make_params(k_p, C_in, dilations)

    # Default path: module-parity output (NCHW, f32 epilogue).
    y = aspp_plus_forward(x, params, dilations)
    jax.block_until_ready(y)
    assert y.shape == (N, 256, H, W), y.shape
    assert bool(jnp.all(jnp.isfinite(y)))

    # loose tolerance: kernel uses bf16 operands with f32 accumulation
    y_ref = _reference_forward(x, params, dilations)
    rel_err = jnp.linalg.norm(y - y_ref) / (jnp.linalg.norm(y_ref) + 1e-12)
    assert float(rel_err) < 5e-2, float(rel_err)

    # Fast path (per review): bf16 writeback, NHWC output (no wrapper transpose).
    y_fast = aspp_plus_forward(x, params, dilations,
                               out_dtype=jnp.bfloat16, layout="NHWC")
    jax.block_until_ready(y_fast)
    assert y_fast.shape == (N, H, W, 256), y_fast.shape
    y_ref_nhwc = jnp.transpose(y_ref, (0, 2, 3, 1))
    rel_err_fast = (jnp.linalg.norm(y_fast.astype(jnp.float32) - y_ref_nhwc)
                    / (jnp.linalg.norm(y_ref_nhwc) + 1e-12))
    assert float(rel_err_fast) < 5e-2, float(rel_err_fast)

    print("KERNEL_OK")
</pallas_src>

<mosaic_0001>
module attributes {stable_mosaic.version = 11 : i64} {
  func.func @_matmul_bias_kernel(%arg0: i32, %arg1: i32, %arg2: memref<1x128x128xbf16, #tpu.memory_space<vmem>>, %arg3: memref<128x256xbf16, #tpu.memory_space<vmem>>, %arg4: memref<1x1x256xf32, #tpu.memory_space<vmem>>, %arg5: memref<1x128x256xf32, #tpu.memory_space<vmem>>) attributes {dimension_semantics = [#tpu.dimension_semantics<parallel>, #tpu.dimension_semantics<parallel>], iteration_bounds = array<i64: 2, 2>, scalar_prefetch = 0 : i64, scratch_operands = 0 : i64, tpu.core_type = #tpu.core_type<tc>, window_params = [{transform_indices = @transform_0, window_bounds = array<i64: 1, 128, 128>}, {pipeline_mode = #tpu.pipeline_mode<synchronous>, transform_indices = @transform_1, window_bounds = array<i64: 128, 256>}, {transform_indices = @transform_2, window_bounds = array<i64: 1, 1, 256>}, {transform_indices = @transform_3, window_bounds = array<i64: 1, 128, 256>}]} {
    %c0 = arith.constant 0 : index
    %c0_0 = arith.constant 0 : index
    %c0_1 = arith.constant 0 : index
    %0 = vector.load %arg2[%c0, %c0_0, %c0_1] : memref<1x128x128xbf16, #tpu.memory_space<vmem>>, vector<1x128x128xbf16>
    %1 = vector.shape_cast %0 : vector<1x128x128xbf16> to vector<128x128xbf16>
    %c0_2 = arith.constant 0 : index
    %c0_3 = arith.constant 0 : index
    %2 = vector.load %arg3[%c0_2, %c0_3] : memref<128x256xbf16, #tpu.memory_space<vmem>>, vector<128x256xbf16>
    %cst = arith.constant dense<0.000000e+00> : vector<128x256xf32>
    %3 = tpu.matmul %1, %2, %cst {dimension_numbers = #tpu.dot_dimension_numbers<[1], [0], [0], [1], [0, 0, 1, 1], [], []>} : vector<128x128xbf16>, vector<128x256xbf16>, vector<128x256xf32> -> vector<128x256xf32>
    %c0_4 = arith.constant 0 : index
    %c0_5 = arith.constant 0 : index
    %c0_6 = arith.constant 0 : index
    %4 = vector.load %arg4[%c0_4, %c0_5, %c0_6] : memref<1x1x256xf32, #tpu.memory_space<vmem>>, vector<1x1x256xf32>
    %5 = vector.shape_cast %4 : vector<1x1x256xf32> to vector<1x256xf32>
    %6 = vector.broadcast %5 : vector<1x256xf32> to vector<128x256xf32>
    %7 = arith.addf %3, %6 : vector<128x256xf32>
    %c0_7 = arith.constant 0 : index
    %c0_8 = arith.constant 0 : index
    %c0_9 = arith.constant 0 : index
    %8 = vector.load %arg5[%c0_7, %c0_8, %c0_9] : memref<1x128x256xf32, #tpu.memory_space<vmem>>, vector<1x128x256xf32>
    %9 = vector.shape_cast %8 : vector<1x128x256xf32> to vector<128x256xf32>
    %10 = vector.shape_cast %7 : vector<128x256xf32> to vector<1x128x256xf32>
    tpu.vector_store %arg5[%c0_7, %c0_8, %c0_9], %10 {strides = array<i32>} : memref<1x128x256xf32, #tpu.memory_space<vmem>>, vector<1x128x256xf32>,
    return
  }
  func.func @transform_0(%arg0: i32, %arg1: i32) -> (i32, i32, i32) {
    %c0_i32 = arith.constant 0 : i32
    %c0_i32_0 = arith.constant 0 : i32
    return %arg0, %arg1, %c0_i32 : i32, i32, i32
  }
  func.func @transform_1(%arg0: i32, %arg1: i32) -> (i32, i32) {
    %c0_i32 = arith.constant 0 : i32
    %c0_i32_0 = arith.constant 0 : i32
    %c0_i32_1 = arith.constant 0 : i32
    return %c0_i32, %c0_i32_0 : i32, i32
  }
  func.func @transform_2(%arg0: i32, %arg1: i32) -> (i32, i32, i32) {
    %c0_i32 = arith.constant 0 : i32
    %c0_i32_0 = arith.constant 0 : i32
    %c0_i32_1 = arith.constant 0 : i32
    return %arg0, %c0_i32, %c0_i32_0 : i32, i32, i32
  }
  func.func @transform_3(%arg0: i32, %arg1: i32) -> (i32, i32, i32) {
    %c0_i32 = arith.constant 0 : i32
    %c0_i32_0 = arith.constant 0 : i32
    return %arg0, %arg1, %c0_i32 : i32, i32, i32
  }
}

</mosaic_0001>

<llo_original>
// kernel: aspp_plus_forward.1
$region0: #{aspp_plus_forward.1}
  #allocation0 [shape = 'u32[]', space=smem, size = 0x4, offset = 0x4, fixed_abs, tag = 'smem constant byte address 0x4 - core index']
  #allocation1 [shape = 'u32[144,128]{1,0:T(1,128)}', space=vmem, size = 0x12000, scoped, tag = 'internal scratch']
  %s0 = inlined_call_operand.hbm [shape: bf16[2,256,128], index: 0, kind: input, shape index: {}]
  %s1 = inlined_call_operand.hbm [shape: bf16[128,256], index: 1, kind: input, shape index: {}]
  %s2 = inlined_call_operand.hbm [shape: f32[2,1,256], index: 2, kind: input, shape index: {}]
  %s3 = inlined_call_operand.hbm [shape: f32[2,256,256], index: 3, kind: output, shape index: {}]
  %s4 = sld [smem:[#allocation0]]
  $region57: #{aspp_plus_forward.1} parent=0
    _
  %s6 = ssub.s32 1, %s4
  %s7 = scalar_select 0, %s6, %s4
  $region1: #{aspp_plus_forward.1} parent=0
    #allocation2 [shape = 'u8[65536]{0}', space=vmem, size = 0x10000, scoped, tag = 'input window, operand 0']
    #allocation3 [shape = 's32[2]{0}', space=sflag, size = 0x8, scoped, tag = 'scoped memory for aspp_plus_forward.1']
    #allocation4 [shape = 's32[2]{0}', space=sflag, size = 0x8, scoped, tag = 'scoped memory for aspp_plus_forward.1']
    #allocation5 [shape = 'u8[65536]{0}', space=vmem, size = 0x10000, scoped, tag = 'input window, operand 1, single buffered']
    #allocation6 [shape = 's32[1]{0}', space=sflag, size = 0x4, scoped, tag = 'scoped memory for aspp_plus_forward.1']
    #allocation7 [shape = 'u8[2048]{0}', space=vmem, size = 0x800, scoped, tag = 'input window, operand 2']
    #allocation8 [shape = 'u8[262144]{0}', space=vmem, size = 0x40000, scoped, tag = 'output window, operand 0']
    %8 = vsyncpa [#allocation3], 0
    %s9 = scalar_lea.sflag [#allocation3], 1
    %10 = vsyncpa %s9, 0
    %11 = vsyncpa [#allocation6], 0
    %12 = vsyncpa [#allocation4], 0
    %s13 = scalar_lea.sflag [#allocation4], 1
    %14 = vsyncpa %s13, 0
    loop: start=0, step=1, limit=6
    $region2: #{aspp_plus_forward.1} parent=1 // loop_pre_header
      _
    $region3: #{aspp_plus_forward.1} parent=1 // loop_header
      %s16 = sphi 0, %s20
      %p17 = scmp.ge.s32.totalorder %s16, 6
      %s23 = sphi 0, %s35
      %s24 = sphi 0, %s31
      %s25 = sphi 0, %s23
      %s26 = sphi 0, %s24
      %s27 = sphi 0, %s25
      %s28 = sphi 0, %s26
      %s40 = sphi 0, %s42
      %s43 = sphi 0, %s40
      %s44 = sphi 0, %s43
      %s60 = sphi 0, %s44
      %s64 = sphi 0, %s64
      %s66 = sphi 0, %s64
      %s67 = sphi 0, %s66
      %s81 = sphi 0, %s67
      %s87 = sphi 0, %s89
      %s90 = sphi 0, %s87
      %s91 = sphi 0, %s90
      %s107 = sphi 0, %s91
      %s115 = sphi 0, %s117
      %s118 = sphi 0, %s115
      %s119 = sphi 0, %s118
      %s135 = sphi 0, %s119
    $region4: #{aspp_plus_forward.1} parent=1 // loop_header_branch
      %19 = sbr.rel (%p17) target = $region8
    $region5: #{aspp_plus_forward.1} parent=1 // loop_body
      %s21 = ssub.s32 %s16, 1
      %s22 = ssub.s32 %s16, 2
      %s29 = sadd.s32 1, %s24
      %p30 = scmp.ge.s32.totalorder %s29, 2
      %s31 = scalar_select %p30, 0, %s29
      %s32 = sadd.s32 1, %s23
      %s33 = scalar_select %p30, %s32, %s23
      %p34 = scmp.ge.s32.totalorder %s33, 2
      %s35 = scalar_select %p34, 0, %s33
      %s36 = ssub.s32 %s23, %s35
      %s37 = ssub.s32 %s24, %s31
      %s38 = sor.u32 %s36, %s37
      %p39 = scmp.eq.s32.totalorder %s38, 0
      %s41 = sadd.s32 %s40, 1
      %s42 = scalar_select %p39, %s40, %s41
      %p45 = pneg %p39
      %p46 = scmp.eq.s32.totalorder %s16, 3
      %p47 = por %p45, %p46
      %p48 = scmp.ne.s32.totalorder %s40, %s43
      %p49 = scmp.eq.s32.totalorder %s16, 0
      %p50 = por %p48, %p49
      %p51 = scmp.ne.s32.totalorder %s40, %s43
      %p52 = scmp.eq.s32.totalorder %s21, 3
      %p53 = por %p51, %p52
      %p54 = scmp.ne.s32.totalorder %s43, %s44
      %p55 = scmp.eq.s32.totalorder %s21, 0
      %p56 = por %p54, %p55
      %p57 = scmp.ne.s32.totalorder %s43, %s44
      %p58 = scmp.eq.s32.totalorder %s22, 3
      %p59 = por %p57, %p58
      %p61 = scmp.ne.s32.totalorder %s44, %s60
      %p62 = scmp.eq.s32.totalorder %s22, 0
      %p63 = por %p61, %p62
      %s65 = sadd.s32 %s64, 1
      %p68 = scmp.eq.s32.totalorder %s16, 3
      %p69 = scmp.ne.s32.totalorder %s64, %s66
      %p70 = scmp.eq.s32.totalorder %s16, 0
      %p71 = por %p69, %p70
      %p72 = scmp.ne.s32.totalorder %s64, %s66
      %p73 = scmp.eq.s32.totalorder %s21, 3
      %p74 = por %p72, %p73
      %p75 = scmp.ne.s32.totalorder %s66, %s67
      %p76 = scmp.eq.s32.totalorder %s21, 0
      %p77 = por %p75, %p76
      %p78 = scmp.ne.s32.totalorder %s66, %s67
      %p79 = scmp.eq.s32.totalorder %s22, 3
      %p80 = por %p78, %p79
      %p82 = scmp.ne.s32.totalorder %s67, %s81
      %p83 = scmp.eq.s32.totalorder %s22, 0
      %p84 = por %p82, %p83
      %s85 = ssub.s32 %s23, %s35
      %p86 = scmp.eq.s32.totalorder %s85, 0
      %s88 = sadd.s32 %s87, 1
      %s89 = scalar_select %p86, %s87, %s88
      %p92 = pneg %p86
      %p93 = scmp.eq.s32.totalorder %s16, 3
      %p94 = por %p92, %p93
      %p95 = scmp.ne.s32.totalorder %s87, %s90
      %p96 = scmp.eq.s32.totalorder %s16, 0
      %p97 = por %p95, %p96
      %p98 = scmp.ne.s32.totalorder %s87, %s90
      %p99 = scmp.eq.s32.totalorder %s21, 3
      %p100 = por %p98, %p99
      %p101 = scmp.ne.s32.totalorder %s90, %s91
      %p102 = scmp.eq.s32.totalorder %s21, 0
      %p103 = por %p101, %p102
      %p104 = scmp.ne.s32.totalorder %s90, %s91
      %p105 = scmp.eq.s32.totalorder %s22, 3
      %p106 = por %p104, %p105
      %p108 = scmp.ne.s32.totalorder %s91, %s107
      %p109 = scmp.eq.s32.totalorder %s22, 0
      %p110 = por %p108, %p109
      %s111 = ssub.s32 %s23, %s35
      %s112 = ssub.s32 %s24, %s31
      %s113 = sor.u32 %s111, %s112
      %p114 = scmp.eq.s32.totalorder %s113, 0
      %s116 = sadd.s32 %s115, 1
      %s117 = scalar_select %p114, %s115, %s116
      %p120 = pneg %p114
      %p121 = scmp.eq.s32.totalorder %s16, 3
      %p122 = por %p120, %p121
      %p123 = scmp.ne.s32.totalorder %s115, %s118
      %p124 = scmp.eq.s32.totalorder %s16, 0
      %p125 = por %p123, %p124
      %p126 = scmp.ne.s32.totalorder %s115, %s118
      %p127 = scmp.eq.s32.totalorder %s21, 3
      %p128 = por %p126, %p127
      %p129 = scmp.ne.s32.totalorder %s118, %s119
      %p130 = scmp.eq.s32.totalorder %s21, 0
      %p131 = por %p129, %p130
      %p132 = scmp.ne.s32.totalorder %s118, %s119
      %p133 = scmp.eq.s32.totalorder %s22, 3
      %p134 = por %p132, %p133
      %p136 = scmp.ne.s32.totalorder %s119, %s135
      %p137 = scmp.eq.s32.totalorder %s22, 0
      %p138 = por %p136, %p137
      %p139 = scmp.le.s32.totalorder 1, %s16
      %p140 = scmp.lt.s32.totalorder %s16, 5
      %p141 = pnand %p139, %p140
      %p142 = pneg %p141
      // Predicated region
      $region9: #{aspp_plus_forward.1} parent=5 // pred_check
        _
      $region10: #{aspp_plus_forward.1} parent=5 // pred_check_branch
        %144 = sbr.rel (%p141) target = $region12
      $region11: #{aspp_plus_forward.1} parent=5 // pred_region
        %s145 = ssub.s32 %s16, 1
        // Predicated region
        $region13: #{aspp_plus_forward.1} parent=11 // pred_check
          %p146 = pneg %p77
        $region14: #{aspp_plus_forward.1} parent=11 // pred_check_branch
          %148 = sbr.rel (%p146) target = $region16
        $region15: #{aspp_plus_forward.1} parent=11 // pred_region
          %s150 = ssub.s32 2048, 2048
          %151 = vsyncadd [#allocation6], %s150
          %s152 = sshll.u32 [#allocation5], 4
          %s153 = int_to_ptr.vmem [resolvable:$true] %s152
          %158 = dma.hbm_to_vmem [thread:$0]  %s1, 2048, %s153, [#allocation6], 128, 128, 8
        $region16: #{aspp_plus_forward.1} parent=11 // pred_fallthru
          _
      $region12: #{aspp_plus_forward.1} parent=5 // pred_fallthru
        _
      %p159 = scmp.lt.s32.totalorder %s16, 4
      // Predicated region
      $region17: #{aspp_plus_forward.1} parent=5 // pred_check
        %p160 = pneg %p159
      $region18: #{aspp_plus_forward.1} parent=5 // pred_check_branch
        %162 = sbr.rel (%p160) target = $region20
      $region19: #{aspp_plus_forward.1} parent=5 // pred_region
        // Predicated region
        $region21: #{aspp_plus_forward.1} parent=19 // pred_check
          %p163 = pneg %p50
        $region22: #{aspp_plus_forward.1} parent=19 // pred_check_branch
          %165 = sbr.rel (%p163) target = $region24
        $region23: #{aspp_plus_forward.1} parent=19 // pred_region
          %s166 = sand.u32 %s16, 1
          %s167 = scalar_lea.sflag [#allocation3], %s166
          %s168 = sand.u32 %s40, 1
          %s169 = smul.addr %s168, 64
          %s170 = scalar_lea.vmem [#allocation2], %s169
          %s171 = smul.u32 16, %s24
          %s173 = ssub.s32 1024, 1024
          %174 = vsyncadd %s167, %s173
          %s175 = smul.addr %s23, 32
          %s176 = sadd.s32 %s171, %s175
          %s177 = smul.addr %s176, 64
          %s178 = scalar_lea.hbm %s0, %s177
          %s179 = sshll.u32 %s170, 4
          %s180 = int_to_ptr.vmem [resolvable:$true] %s179
          %185 = dma.hbm_to_vmem [thread:$0]  %s178, 1024, %s180, %s167, 64, 64, 4
        $region24: #{aspp_plus_forward.1} parent=19 // pred_fallthru
          _
        // Predicated region
        $region25: #{aspp_plus_forward.1} parent=19 // pred_check
          %p186 = pneg %p97
        $region26: #{aspp_plus_forward.1} parent=19 // pred_check_branch
          %188 = sbr.rel (%p186) target = $region28
        $region27: #{aspp_plus_forward.1} parent=19 // pred_region
          %s189 = sand.u32 %s16, 1
          %s190 = scalar_lea.sflag [#allocation3], %s189
          %s191 = sand.u32 %s87, 1
          %s192 = smul.addr %s191, 2
          %s193 = scalar_lea.vmem [#allocation7], %s192
          %s195 = ssub.s32 32, 32
          %196 = vsyncadd %s190, %s195
          %s197 = smul.addr %s23, 2
          %s198 = smul.addr %s197, 16
          %s199 = scalar_lea.hbm %s2, %s198
          %s201 = sshll.u32 %s193, 4
          %s202 = int_to_ptr.vmem [resolvable:$true] %s201
          %204 = dma.hbm_to_vmem [thread:$0]  %s199, 32, %s202, %s190
        $region28: #{aspp_plus_forward.1} parent=19 // pred_fallthru
          _
      $region20: #{aspp_plus_forward.1} parent=5 // pred_fallthru
        _
      %p205 = scmp.le.s32.totalorder 1, %s16
      %p206 = scmp.lt.s32.totalorder %s16, 5
      %p207 = pnand %p205, %p206
      %p208 = pneg %p207
      // Predicated region
      $region29: #{aspp_plus_forward.1} parent=5 // pred_check
        _
      $region30: #{aspp_plus_forward.1} parent=5 // pred_check_branch
        %210 = sbr.rel (%p207) target = $region32
      $region31: #{aspp_plus_forward.1} parent=5 // pred_region
        %s211 = ssub.s32 %s16, 1
        %s212 = sand.u32 %s21, 1
        %s213 = scalar_lea.sflag [#allocation3], %s212
        %s214 = sand.u32 %s43, 1
        %s215 = smul.addr %s214, 64
        %s216 = scalar_lea.vmem [#allocation2], %s215
        // Predicated region
        $region33: #{aspp_plus_forward.1} parent=31 // pred_check
          %p217 = pneg %p56
        $region34: #{aspp_plus_forward.1} parent=31 // pred_check_branch
          %219 = sbr.rel (%p217) target = $region36
        $region35: #{aspp_plus_forward.1} parent=31 // pred_region
          %220 = dma.done %s213, 1024
        $region36: #{aspp_plus_forward.1} parent=31 // pred_fallthru
          _
        // Predicated region
        $region37: #{aspp_plus_forward.1} parent=31 // pred_check
          %p221 = pneg %p77
        $region38: #{aspp_plus_forward.1} parent=31 // pred_check_branch
          %223 = sbr.rel (%p221) target = $region40
        $region39: #{aspp_plus_forward.1} parent=31 // pred_region
          %224 = dma.done [#allocation6], 2048
        $region40: #{aspp_plus_forward.1} parent=31 // pred_fallthru
          _
        %s225 = sand.u32 %s21, 1
        %s226 = scalar_lea.sflag [#allocation3], %s225
        %s227 = sand.u32 %s90, 1
        %s228 = smul.addr %s227, 2
        %s229 = scalar_lea.vmem [#allocation7], %s228
        // Predicated region
        $region41: #{aspp_plus_forward.1} parent=31 // pred_check
          %p230 = pneg %p103
        $region42: #{aspp_plus_forward.1} parent=31 // pred_check_branch
          %232 = sbr.rel (%p230) target = $region44
        $region43: #{aspp_plus_forward.1} parent=31 // pred_region
          %233 = dma.done %s226, 32
        $region44: #{aspp_plus_forward.1} parent=31 // pred_fallthru
          _
        %s234 = sand.u32 %s21, 1
        %s235 = scalar_lea.sflag [#allocation3], %s234
        %s236 = sand.u32 %s43, 1
        %s237 = smul.addr %s236, 64
        %s238 = scalar_lea.vmem [#allocation2], %s237
        %p239 = pneg %p56
        %p240 = pneg %p53
        %p241 = pneg %p77
        %p242 = pneg %p74
        %s243 = sand.u32 %s21, 1
        %s244 = scalar_lea.sflag [#allocation3], %s243
        %s245 = sand.u32 %s90, 1
        %s246 = smul.addr %s245, 2
        %s247 = scalar_lea.vmem [#allocation7], %s246
        %p248 = pneg %p103
        %p249 = pneg %p100
        %p250 = pneg %p131
        %p251 = pneg %p128
        %s252 = sand.u32 %s118, 1
        %s253 = scalar_lea.sflag [#allocation4], %s252
        %s254 = sand.u32 %s118, 1
        %s255 = smul.addr %s254, 256
        %s256 = scalar_lea.vmem [#allocation8], %s255
        %s257 = smul.u32 16, %s26
        %s258 = smul.u32 16, %s26
        %v260 = vld [vmem:[%s216] sm:$0xf]
        %v261 = vld [vmem:[%s216 + $0x4] sm:$0xf]
        %v262 = vld [vmem:[%s216 + $0x8] sm:$0xf]
        %v263 = vld [vmem:[%s216 + $0xc] sm:$0xf]
        %v264 = vld [vmem:[%s216 + $0x10] sm:$0xf]
        %v265 = vld [vmem:[%s216 + $0x14] sm:$0xf]
        %v266 = vld [vmem:[%s216 + $0x18] sm:$0xf]
        %v267 = vld [vmem:[%s216 + $0x1c] sm:$0xf]
        %v268 = vld [vmem:[%s216 + $0x20] sm:$0xf]
        %v269 = vld [vmem:[%s216 + $0x24] sm:$0xf]
        %v270 = vld [vmem:[%s216 + $0x28] sm:$0xf]
        %v271 = vld [vmem:[%s216 + $0x2c] sm:$0xf]
        %v272 = vld [vmem:[%s216 + $0x30] sm:$0xf]
        %v273 = vld [vmem:[%s216 + $0x34] sm:$0xf]
        %v274 = vld [vmem:[%s216 + $0x38] sm:$0xf]
        %v275 = vld [vmem:[%s216 + $0x3c] sm:$0xf]
        %v276 = vld [vmem:[#allocation5] sm:$0xff]
        %v277 = vld [vmem:[#allocation5 + $0x8] sm:$0xff]
        %v278 = vld [vmem:[#allocation5 + $0x10] sm:$0xff]
        %v279 = vld [vmem:[#allocation5 + $0x18] sm:$0xff]
        %v280 = vld [vmem:[#allocation5 + $0x20] sm:$0xff]
        %v281 = vld [vmem:[#allocation5 + $0x28] sm:$0xff]
        %v282 = vld [vmem:[#allocation5 + $0x30] sm:$0xff]
        %v283 = vld [vmem:[#allocation5 + $0x38] sm:$0xff]
        %v284 = vld [vmem:[#allocation5 + $0x40] sm:$0xff]
        %v285 = vld [vmem:[#allocation5 + $0x48] sm:$0xff]
        %v286 = vld [vmem:[#allocation5 + $0x50] sm:$0xff]
        %v287 = vld [vmem:[#allocation5 + $0x58] sm:$0xff]
        %v288 = vld [vmem:[#allocation5 + $0x60] sm:$0xff]
        %v289 = vld [vmem:[#allocation5 + $0x68] sm:$0xff]
        %v290 = vld [vmem:[#allocation5 + $0x70] sm:$0xff]
        %v291 = vld [vmem:[#allocation5 + $0x78] sm:$0xff]
        %v292 = vld [vmem:[%s229] sm:$0x3]
        %v294 = vlaneseq
        %v295 = vshrl.u32 %v294, 7
        %v296 = vsub.s32 0, %v295
        %v297 = vrot.slane %v292, %v296
        %v298 = vlaneseq
        %v299 = vshrl.u32 %v298, 7
        %v300 = vsub.s32 1, %v299
        %v301 = vrot.slane %v292, %v300
        %v320 = vunpack.c.l.b16 %v260
        %v321 = vunpack.c.l.b16 %v261
        %v322 = vunpack.c.l.b16 %v262
        %v323 = vunpack.c.l.b16 %v263
        %v324 = vunpack.c.l.b16 %v264
        %v325 = vunpack.c.l.b16 %v265
        %v326 = vunpack.c.l.b16 %v266
        %v327 = vunpack.c.l.b16 %v267
        %v328 = vunpack.c.l.b16 %v268
        %v329 = vunpack.c.l.b16 %v269
        %v330 = vunpack.c.l.b16 %v270
        %v331 = vunpack.c.l.b16 %v271
        %v332 = vunpack.c.l.b16 %v272
        %v333 = vunpack.c.l.b16 %v273
        %v334 = vunpack.c.l.b16 %v274
        %v335 = vunpack.c.l.b16 %v275
        %v336 = vpack.c.b16 %v321, %v320
        %v337 = vpack.c.b16 %v323, %v322
        %v338 = vpack.c.b16 %v325, %v324
        %v339 = vpack.c.b16 %v327, %v326
        %v340 = vpack.c.b16 %v329, %v328
        %v341 = vpack.c.b16 %v331, %v330
        %v342 = vpack.c.b16 %v333, %v332
        %v343 = vpack.c.b16 %v335, %v334
        %v368 = vunpack.c.l.b16 %v276
        %v369 = vunpack.c.h.b16 %v276
        %v370 = vunpack.c.l.b16 %v277
        %v371 = vunpack.c.h.b16 %v277
        %v372 = vunpack.c.l.b16 %v278
        %v373 = vunpack.c.h.b16 %v278
        %v374 = vunpack.c.l.b16 %v279
        %v375 = vunpack.c.h.b16 %v279
        %v376 = vunpack.c.l.b16 %v280
        %v377 = vunpack.c.h.b16 %v280
        %v378 = vunpack.c.l.b16 %v281
        %v379 = vunpack.c.h.b16 %v281
        %v380 = vunpack.c.l.b16 %v282
        %v381 = vunpack.c.h.b16 %v282
        %v382 = vunpack.c.l.b16 %v283
        %v383 = vunpack.c.h.b16 %v283
        %v384 = vunpack.c.l.b16 %v284
        %v385 = vunpack.c.h.b16 %v284
        %v386 = vunpack.c.l.b16 %v285
        %v387 = vunpack.c.h.b16 %v285
        %v388 = vunpack.c.l.b16 %v286
        %v389 = vunpack.c.h.b16 %v286
        %v390 = vunpack.c.l.b16 %v287
        %v391 = vunpack.c.h.b16 %v287
        %v392 = vunpack.c.l.b16 %v288
        %v393 = vunpack.c.h.b16 %v288
        %v394 = vunpack.c.l.b16 %v289
        %v395 = vunpack.c.h.b16 %v289
        %v396 = vunpack.c.l.b16 %v290
        %v397 = vunpack.c.h.b16 %v290
        %v398 = vunpack.c.l.b16 %v291
        %v399 = vunpack.c.h.b16 %v291
        %v400 = vpack.c.b16 %v370, %v368
        %v401 = vpack.c.b16 %v371, %v369
        %v402 = vpack.c.b16 %v374, %v372
        %v403 = vpack.c.b16 %v375, %v373
        %v404 = vpack.c.b16 %v378, %v376
        %v405 = vpack.c.b16 %v379, %v377
        %v406 = vpack.c.b16 %v382, %v380
        %v407 = vpack.c.b16 %v383, %v381
        %v408 = vpack.c.b16 %v386, %v384
        %v409 = vpack.c.b16 %v387, %v385
        %v410 = vpack.c.b16 %v390, %v388
        %v411 = vpack.c.b16 %v391, %v389
        %v412 = vpack.c.b16 %v394, %v392
        %v413 = vpack.c.b16 %v395, %v393
        %v414 = vpack.c.b16 %v398, %v396
        %v415 = vpack.c.b16 %v399, %v397
        %432 = vmatprep.subr.bf16.mxu0 %v401
        %433 = vmatpush1.bf16.msra.mxu0 %v400
        %434 = vmatprep.subr.bf16.mxu0 %v403
        %435 = vmatpush1.bf16.msra.mxu0 %v402
        %436 = vmatprep.subr.bf16.mxu0 %v405
        %437 = vmatpush1.bf16.msra.mxu0 %v404
        %438 = vmatprep.subr.bf16.mxu0 %v407
        %439 = vmatpush1.bf16.msra.mxu0 %v406
        %440 = vmatprep.subr.bf16.mxu0 %v409
        %441 = vmatpush1.bf16.msra.mxu0 %v408
        %442 = vmatprep.subr.bf16.mxu0 %v411
        %443 = vmatpush1.bf16.msra.mxu0 %v410
        %444 = vmatprep.subr.bf16.mxu0 %v413
        %445 = vmatpush1.bf16.msra.mxu0 %v412
        %446 = vmatprep.subr.bf16.mxu0 %v415
        %447 = vmatpush1.bf16.msra.mxu0 %v414
        %448 = vmatprep.subr.bf16.mxu0 0
        %449 = vmatpush1.bf16.msra.mxu0 0
        %450 = vmatprep.subr.bf16.mxu0 0
        %451 = vmatpush1.bf16.msra.mxu0 0
        %452 = vmatprep.subr.bf16.mxu0 0
        %453 = vmatpush1.bf16.msra.mxu0 0
        %454 = vmatprep.subr.bf16.mxu0 0
        %455 = vmatpush1.bf16.msra.mxu0 0
        %456 = vmatprep.subr.bf16.mxu0 0
        %457 = vmatpush1.bf16.msra.mxu0 0
        %458 = vmatprep.subr.bf16.mxu0 0
        %459 = vmatpush1.bf16.msra.mxu0 0
        %460 = vmatprep.subr.bf16.mxu0 0
        %461 = vmatpush1.bf16.msra.mxu0 0
        %462 = vmatprep.subr.bf16.mxu0 0
        %463 = vmatpush1.bf16.msra.mxu0 0
        %464 = vmatprep.mubr.bf16.mxu0 0
        %465 = vmatmul.mubr.bf16.gmra.mrb[0].mxu0 %v336
        %v466 = vpop.f32.mrb[0].mxu0
        %v467 = vadd.f32 %v297, %v466
        %v468 = vpop.f32.mrb[0].mxu0
        %v469 = vadd.f32 %v301, %v468
        %v470 = vpop.f32.mrb[0].mxu0
        %v471 = vadd.f32 %v297, %v470
        %v472 = vpop.f32.mrb[0].mxu0
        %v473 = vadd.f32 %v301, %v472
        %474 = vmatprep.mubr.bf16.mxu0 0
        %475 = vmatmul.mubr.bf16.gmra.mrb[0].mxu0 %v337
        %v476 = vpop.f32.mrb[0].mxu0
        %v477 = vadd.f32 %v297, %v476
        %v478 = vpop.f32.mrb[0].mxu0
        %v479 = vadd.f32 %v301, %v478
        %v480 = vpop.f32.mrb[0].mxu0
        %v481 = vadd.f32 %v297, %v480
        %v482 = vpop.f32.mrb[0].mxu0
        %v483 = vadd.f32 %v301, %v482
        %484 = vmatprep.mubr.bf16.mxu0 0
        %485 = vmatmul.mubr.bf16.gmra.mrb[0].mxu0 %v338
        %v486 = vpop.f32.mrb[0].mxu0
        %v487 = vadd.f32 %v297, %v486
        %v488 = vpop.f32.mrb[0].mxu0
        %v489 = vadd.f32 %v301, %v488
        %v490 = vpop.f32.mrb[0].mxu0
        %v491 = vadd.f32 %v297, %v490
        %v492 = vpop.f32.mrb[0].mxu0
        %v493 = vadd.f32 %v301, %v492
        %494 = vmatprep.mubr.bf16.mxu0 0
        %495 = vmatmul.mubr.bf16.gmra.mrb[0].mxu0 %v339
        %v496 = vpop.f32.mrb[0].mxu0
        %v497 = vadd.f32 %v297, %v496
        %v498 = vpop.f32.mrb[0].mxu0
        %v499 = vadd.f32 %v301, %v498
        %v500 = vpop.f32.mrb[0].mxu0
        %v501 = vadd.f32 %v297, %v500
        %v502 = vpop.f32.mrb[0].mxu0
        %v503 = vadd.f32 %v301, %v502
        %504 = vmatprep.mubr.bf16.mxu0 0
        %505 = vmatmul.mubr.bf16.gmra.mrb[0].mxu0 %v340
        %v506 = vpop.f32.mrb[0].mxu0
        %v507 = vadd.f32 %v297, %v506
        %v508 = vpop.f32.mrb[0].mxu0
        %v509 = vadd.f32 %v301, %v508
        %v510 = vpop.f32.mrb[0].mxu0
        %v511 = vadd.f32 %v297, %v510
        %v512 = vpop.f32.mrb[0].mxu0
        %v513 = vadd.f32 %v301, %v512
        %514 = vmatprep.mubr.bf16.mxu0 0
        %515 = vmatmul.mubr.bf16.gmra.mrb[0].mxu0 %v341
        %v516 = vpop.f32.mrb[0].mxu0
        %v517 = vadd.f32 %v297, %v516
        %v518 = vpop.f32.mrb[0].mxu0
        %v519 = vadd.f32 %v301, %v518
        %v520 = vpop.f32.mrb[0].mxu0
        %v521 = vadd.f32 %v297, %v520
        %v522 = vpop.f32.mrb[0].mxu0
        %v523 = vadd.f32 %v301, %v522
        %524 = vmatprep.mubr.bf16.mxu0 0
        %525 = vmatmul.mubr.bf16.gmra.mrb[0].mxu0 %v342
        %v526 = vpop.f32.mrb[0].mxu0
        %v527 = vadd.f32 %v297, %v526
        %v528 = vpop.f32.mrb[0].mxu0
        %v529 = vadd.f32 %v301, %v528
        %v530 = vpop.f32.mrb[0].mxu0
        %v531 = vadd.f32 %v297, %v530
        %v532 = vpop.f32.mrb[0].mxu0
        %v533 = vadd.f32 %v301, %v532
        %534 = vmatprep.mubr.bf16.mxu0 0
        %535 = vmatmul.mubr.bf16.gmra.mrb[0].mxu0 %v343
        %v536 = vpop.f32.mrb[0].mxu0
        %v537 = vadd.f32 %v297, %v536
        %v538 = vpop.f32.mrb[0].mxu0
        %v539 = vadd.f32 %v301, %v538
        %v540 = vpop.f32.mrb[0].mxu0
        %v541 = vadd.f32 %v297, %v540
        %v542 = vpop.f32.mrb[0].mxu0
        %v543 = vadd.f32 %v301, %v542
        %544 = vdwg.mxu0
        %545 = vst [vmem:[%s256] sm:$0xff] %v467
        %546 = vst [vmem:[%s256 + $0x8] sm:$0xff] %v469
        %547 = vst [vmem:[%s256 + $0x10] sm:$0xff] %v471
        %548 = vst [vmem:[%s256 + $0x18] sm:$0xff] %v473
        %549 = vst [vmem:[%s256 + $0x20] sm:$0xff] %v477
        %550 = vst [vmem:[%s256 + $0x28] sm:$0xff] %v479
        %551 = vst [vmem:[%s256 + $0x30] sm:$0xff] %v481
        %552 = vst [vmem:[%s256 + $0x38] sm:$0xff] %v483
        %553 = vst [vmem:[%s256 + $0x40] sm:$0xff] %v487
        %554 = vst [vmem:[%s256 + $0x48] sm:$0xff] %v489
        %555 = vst [vmem:[%s256 + $0x50] sm:$0xff] %v491
        %556 = vst [vmem:[%s256 + $0x58] sm:$0xff] %v493
        %557 = vst [vmem:[%s256 + $0x60] sm:$0xff] %v497
        %558 = vst [vmem:[%s256 + $0x68] sm:$0xff] %v499
        %559 = vst [vmem:[%s256 + $0x70] sm:$0xff] %v501
        %560 = vst [vmem:[%s256 + $0x78] sm:$0xff] %v503
        %561 = vst [vmem:[%s256 + $0x80] sm:$0xff] %v507
        %562 = vst [vmem:[%s256 + $0x88] sm:$0xff] %v509
        %563 = vst [vmem:[%s256 + $0x90] sm:$0xff] %v511
        %564 = vst [vmem:[%s256 + $0x98] sm:$0xff] %v513
        %565 = vst [vmem:[%s256 + $0xa0] sm:$0xff] %v517
        %566 = vst [vmem:[%s256 + $0xa8] sm:$0xff] %v519
        %567 = vst [vmem:[%s256 + $0xb0] sm:$0xff] %v521
        %568 = vst [vmem:[%s256 + $0xb8] sm:$0xff] %v523
        %569 = vst [vmem:[%s256 + $0xc0] sm:$0xff] %v527
        %570 = vst [vmem:[%s256 + $0xc8] sm:$0xff] %v529
        %571 = vst [vmem:[%s256 + $0xd0] sm:$0xff] %v531
        %572 = vst [vmem:[%s256 + $0xd8] sm:$0xff] %v533
        %573 = vst [vmem:[%s256 + $0xe0] sm:$0xff] %v537
        %574 = vst [vmem:[%s256 + $0xe8] sm:$0xff] %v539
        %575 = vst [vmem:[%s256 + $0xf0] sm:$0xff] %v541
        %576 = vst [vmem:[%s256 + $0xf8] sm:$0xff] %v543
        %s577 = sand.u32 %s118, 1
        %s578 = scalar_lea.sflag [#allocation4], %s577
        %s579 = sand.u32 %s118, 1
        %s580 = smul.addr %s579, 256
        %s581 = scalar_lea.vmem [#allocation8], %s580
        // Predicated region
        $region45: #{aspp_plus_forward.1} parent=31 // pred_check
          %p582 = pneg %p128
        $region46: #{aspp_plus_forward.1} parent=31 // pred_check_branch
          %584 = sbr.rel (%p582) target = $region48
        $region47: #{aspp_plus_forward.1} parent=31 // pred_region
          %s585 = smul.u32 16, %s26
          %s587 = ssub.s32 4096, 4096
          %588 = vsyncadd %s578, %s587
          %s589 = smul.addr %s585, 2
          %s590 = smul.addr %s25, 64
          %s591 = sadd.s32 %s589, %s590
          %s592 = smul.addr %s591, 128
          %s593 = scalar_lea.hbm %s3, %s592
          %s594 = sshll.u32 %s581, 4
          %s595 = int_to_ptr.vmem [resolvable:$true] %s594
          %600 = dma.vmem_to_hbm [thread:$0]  %s595, 4096, %s593, %s578, 256, 256, 16
        $region48: #{aspp_plus_forward.1} parent=31 // pred_fallthru
          _
      $region32: #{aspp_plus_forward.1} parent=5 // pred_fallthru
        _
      %p601 = scmp.le.s32.totalorder 2, %s16
      // Predicated region
      $region49: #{aspp_plus_forward.1} parent=5 // pred_check
        %p602 = pneg %p601
      $region50: #{aspp_plus_forward.1} parent=5 // pred_check_branch
        %604 = sbr.rel (%p602) target = $region52
      $region51: #{aspp_plus_forward.1} parent=5 // pred_region
        %s605 = ssub.s32 %s16, 2
        // Predicated region
        $region53: #{aspp_plus_forward.1} parent=51 // pred_check
          %p606 = pneg %p134
        $region54: #{aspp_plus_forward.1} parent=51 // pred_check_branch
          %608 = sbr.rel (%p606) target = $region56
        $region55: #{aspp_plus_forward.1} parent=51 // pred_region
          %s609 = sand.u32 %s119, 1
          %s610 = scalar_lea.sflag [#allocation4], %s609
          %s611 = sand.u32 %s119, 1
          %s612 = smul.addr %s611, 256
          %s613 = scalar_lea.vmem [#allocation8], %s612
          %614 = dma.done %s610, 4096
        $region56: #{aspp_plus_forward.1} parent=51 // pred_fallthru
          _
      $region52: #{aspp_plus_forward.1} parent=5 // pred_fallthru
        _
    $region6: #{aspp_plus_forward.1} parent=1 // loop_footer
      %s20 = sadd.s32 1, %s16
    $region7: #{aspp_plus_forward.1} parent=1 // loop_footer_branch
      %15 = sbr.rel target = $region3
    $region8: #{aspp_plus_forward.1} parent=1 // loop_exit
      _
    %615 = vsyncpa [#allocation3], 1
    %s616 = scalar_lea.sflag [#allocation3], 1
    %617 = vsyncpa %s616, 1
    %618 = vsyncpa [#allocation6], 1
    %619 = vsyncpa [#allocation4], 1
    %s620 = scalar_lea.sflag [#allocation4], 1
    %621 = vsyncpa %s620, 1

</llo_original>
